<compile_context>
chip_gen: v7x
topology: tpu7x:2x2x1
jax: 0.10.0
libtpu: 0.0.40
codegen_flags: <defaults>
</compile_context>

<pallas_src>
import jax
import jax.numpy as jnp
from jax.experimental import pallas as pl
from jax.experimental.pallas import tpu as pltpu


# ---------------------------------------------------------------------------
# Device-aware sizing helpers
# ---------------------------------------------------------------------------

# Useful HBM bytes per grid step; sized to amortize ~0.35 us/step pipeline
# overhead even at v7x's ~3.2 TB/s (also comfortably past v5e/v6e rooflines).
_TARGET_STEP_BYTES = 4 << 20


def _round_up(x, m):
    return (x + m - 1) // m * m


def _vmem_capacity_bytes():
    """Physical VMEM of the current TPU (64 MiB v7x, 128 MiB v5e/v6e)."""
    try:
        cap = getattr(pltpu.get_tpu_info(), "vmem_capacity_bytes", None)
        if cap:
            return int(cap)
    except Exception:
        pass
    return 64 << 20  # conservative default (v7x per-TensorCore VMEM)


def _vmem_limit_bytes(working_set, vmem_cap):
    # Raise the scoped-VMEM limit above the per-generation defaults (16 MiB on
    # v5e, 32 MiB on v6e/v7x) but leave >=25% physical headroom.
    return int(min(vmem_cap * 3 // 4, max(32 << 20, working_set + (8 << 20))))


def _choose_tiles(N, Cin, Cout, L, itemsize, vmem_cap):
    """Pick (TB, TL): each step should move multi-MiB of HBM traffic while the
    double-buffered VMEM working set (with sublane padding) stays in budget."""
    cin_pad = _round_up(Cin, 8)
    cout_pad = _round_up(Cout, 8)
    # VMEM cost per (batch-row, lane) cell of the x+out blocks, double buffered.
    vmem_per_cell = 2 * (cin_pad + cout_pad) * itemsize
    # Useful HBM bytes per (batch-row, lane) cell.
    hbm_per_cell = (Cin + Cout) * itemsize
    # Weight tile also lives in VMEM (lane/sublane padded, double buffered).
    w_vmem = 2 * _round_up(Cout, 8) * _round_up(Cin, 128) * itemsize

    vmem_budget = max(int(vmem_cap * 0.45) - w_vmem, 2 << 20)

    # Largest lane tile the budget allows with a single image per step.
    tl_cap = max((vmem_budget // vmem_per_cell) // 128 * 128, 128)

    if L <= tl_cap:
        TL = L  # full pixel axis: always layout-legal, no ragged lane block
        # Fold batches until the step reaches the HBM byte target.
        tb_target = -(-_TARGET_STEP_BYTES // (hbm_per_cell * TL))
        tb_vmem = max(1, vmem_budget // (vmem_per_cell * _round_up(TL, 128)))
        TB = max(1, min(N, tb_target, tb_vmem))
    else:
        # Pixel axis alone exceeds the budget: tile it (multiple of 128; the
        # ragged last block is masked by Pallas).
        TL = tl_cap
        TB = 1
    return TB, TL


def _working_set_bytes(TB, TL, Cin, Cout, itemsize):
    cin_pad = _round_up(Cin, 8)
    cout_pad = _round_up(Cout, 8)
    tl_pad = _round_up(TL, 128)
    act = 2 * TB * (cin_pad + cout_pad) * tl_pad * itemsize   # x + out, 2x buf
    w = 2 * _round_up(Cout, 8) * _round_up(Cin, 128) * itemsize
    return act + w


# ---------------------------------------------------------------------------
# 4D path: (N, Cin, L) -> (N, Cout, L)
# ---------------------------------------------------------------------------

def _conv1x1_kernel(w_ref, x_ref, o_ref):
    # w_ref: (Cout, Cin)   -- resident across the whole grid
    # x_ref: (TB, Cin, TL) -- pixels lane-dense
    # o_ref: (TB, Cout, TL)
    w = w_ref[...]
    tb = x_ref.shape[0]
    if tb == 1:
        o_ref[0] = jnp.dot(
            w, x_ref[0], preferred_element_type=jnp.float32
        ).astype(o_ref.dtype)
    else:
        def body(b, carry):
            o_ref[b] = jnp.dot(
                w, x_ref[b], preferred_element_type=jnp.float32
            ).astype(o_ref.dtype)
            return carry
        jax.lax.fori_loop(0, tb, body, 0, unroll=(tb <= 8))


def conv1x1_ncl(x, w):
    """x: (N, Cin, L) f32, w: (Cout, Cin) f32 -> (N, Cout, L) f32."""
    N, Cin, L = x.shape
    Cout, Cin2 = w.shape
    assert Cin == Cin2
    itemsize = x.dtype.itemsize
    vmem_cap = _vmem_capacity_bytes()

    TB, TL = _choose_tiles(N, Cin, Cout, L, itemsize, vmem_cap)
    nb = pl.cdiv(N, TB)
    nl = pl.cdiv(L, TL)

    # Put the axis with more blocks first so megacore (2 TCs on v7x) always has
    # a long parallel axis to shard, even when N == 1.
    if nl >= nb:
        grid = (nl, nb)
        act_map = lambda l, b: (b, 0, l)
        w_map = lambda l, b: (0, 0)
    else:
        grid = (nb, nl)
        act_map = lambda b, l: (b, 0, l)
        w_map = lambda b, l: (0, 0)

    working = _working_set_bytes(TB, TL, Cin, Cout, itemsize)
    flops = 2 * N * L * Cin * Cout
    bytes_accessed = itemsize * (N * Cin * L + Cin * Cout + N * Cout * L)

    return pl.pallas_call(
        _conv1x1_kernel,
        out_shape=jax.ShapeDtypeStruct((N, Cout, L), x.dtype),
        grid_spec=pltpu.PrefetchScalarGridSpec(
            num_scalar_prefetch=0,
            grid=grid,
            in_specs=[
                pl.BlockSpec((Cout, Cin), w_map),       # tiny, constant block
                pl.BlockSpec((TB, Cin, TL), act_map),   # channels second-minor
            ],
            out_specs=pl.BlockSpec((TB, Cout, TL), act_map),
        ),
        compiler_params=pltpu.CompilerParams(
            dimension_semantics=("parallel", "parallel"),
            vmem_limit_bytes=_vmem_limit_bytes(working, vmem_cap),
        ),
        cost_estimate=pl.CostEstimate(
            flops=flops, transcendentals=0, bytes_accessed=bytes_accessed
        ),
    )(w, x)


# ---------------------------------------------------------------------------
# 2D path: (N, Cin) -> (N, Cout)  (unsqueeze -> 1x1 conv -> squeeze)
# ---------------------------------------------------------------------------

def _rows_kernel(w_ref, x_ref, o_ref):
    # x_ref: (TN, Cin), w_ref: (Cout, Cin), o_ref: (TN, Cout) = x @ w^T
    o_ref[...] = jax.lax.dot_general(
        x_ref[...], w_ref[...],
        dimension_numbers=(((1,), (1,)), ((), ())),
        preferred_element_type=jnp.float32,
    ).astype(o_ref.dtype)


def linear_rows(x, w):
    """x: (N, Cin), w: (Cout, Cin) -> (N, Cout), rows on sublanes."""
    N, Cin = x.shape
    Cout, Cin2 = w.shape
    assert Cin == Cin2
    itemsize = x.dtype.itemsize
    vmem_cap = _vmem_capacity_bytes()

    row_hbm = (Cin + Cout) * itemsize
    row_vmem = 2 * (_round_up(Cin, 128) + _round_up(Cout, 128)) * itemsize
    tn_cap = min(
        max(_TARGET_STEP_BYTES // row_hbm, 8),
        max(int(vmem_cap * 0.45) // row_vmem, 8),
    ) // 8 * 8
    tn_cap = max(tn_cap, 8)
    TN = N if N <= tn_cap else tn_cap  # TN == N is always layout-legal
    grid = (pl.cdiv(N, TN),)

    working = (2 * _round_up(TN, 8)
               * (_round_up(Cin, 128) + _round_up(Cout, 128)) * itemsize
               + 2 * _round_up(Cout, 8) * _round_up(Cin, 128) * itemsize)
    flops = 2 * N * Cin * Cout
    bytes_accessed = itemsize * (N * Cin + Cin * Cout + N * Cout)

    return pl.pallas_call(
        _rows_kernel,
        out_shape=jax.ShapeDtypeStruct((N, Cout), x.dtype),
        grid_spec=pltpu.PrefetchScalarGridSpec(
            num_scalar_prefetch=0,
            grid=grid,
            in_specs=[
                pl.BlockSpec((Cout, Cin), lambda i: (0, 0)),
                pl.BlockSpec((TN, Cin), lambda i: (i, 0)),
            ],
            out_specs=pl.BlockSpec((TN, Cout), lambda i: (i, 0)),
        ),
        compiler_params=pltpu.CompilerParams(
            dimension_semantics=("parallel",),
            vmem_limit_bytes=_vmem_limit_bytes(working, vmem_cap),
        ),
        cost_estimate=pl.CostEstimate(
            flops=flops, transcendentals=0, bytes_accessed=bytes_accessed
        ),
    )(w, x)


# ---------------------------------------------------------------------------
# Module wrapper (matches PyTorch `transformer`)
# ---------------------------------------------------------------------------

def xavier_normal_conv_weight(key, oup, inp):
    """Matches nn.init.xavier_normal_ for a (oup, inp, 1, 1) conv weight."""
    fan_in = inp * 1 * 1
    fan_out = oup * 1 * 1
    std = (2.0 / (fan_in + fan_out)) ** 0.5
    return std * jax.random.normal(key, (oup, inp, 1, 1), dtype=jnp.float32)


class TransformerPallas:
    """JAX/Pallas equivalent of the PyTorch `transformer` module."""

    def __init__(self, inp1, oup1, key):
        self.weight = xavier_normal_conv_weight(key, oup1, inp1)  # (Cout, Cin, 1, 1)
        self._w_oc = self.weight[:, :, 0, 0]                      # (Cout, Cin)

    def __call__(self, inputs):
        if inputs.ndim == 2:
            # (N, Cin): unsqueeze->conv->squeeze == x @ W^T; dedicated kernel,
            # no transposes / extra HBM passes.
            return linear_rows(inputs, self._w_oc)
        # NCHW stays NCHW: merging H,W into H*W is a free reshape.
        N, Cin, H, W = inputs.shape
        x = inputs.reshape(N, Cin, H * W)          # (N, Cin, HW)
        y = conv1x1_ncl(x, self._w_oc)             # (N, Cout, HW)
        return y.reshape(N, -1, H, W)              # (N, Cout, H, W)


if __name__ == "__main__":
    key = jax.random.PRNGKey(0)
    k_w, k_x4, k_x2 = jax.random.split(key, 3)

    inp1, oup1 = 4, 8
    model = TransformerPallas(inp1, oup1, k_w)

    # 4D (NCHW) path
    x4 = jax.random.normal(k_x4, (2, inp1, 16, 16), dtype=jnp.float32)
    y4 = jax.block_until_ready(model(x4))
    assert y4.shape == (2, oup1, 16, 16)

    # 2D path (unsqueeze -> conv -> squeeze)
    x2 = jax.random.normal(k_x2, (2, inp1), dtype=jnp.float32)
    y2 = jax.block_until_ready(model(x2))
    assert y2.shape == (2, oup1)

    # Reference check against plain JAX (1x1 conv, no bias == channel matmul)
    w2d = model.weight[:, :, 0, 0]
    ref4 = jnp.einsum("nchw,oc->nohw", x4, w2d)
    ref2 = x2 @ w2d.T
    assert jnp.allclose(y4, ref4, atol=1e-5, rtol=1e-5)
    assert jnp.allclose(y2, ref2, atol=1e-5, rtol=1e-5)

    print("KERNEL_OK")
</pallas_src>

<mosaic_0001>
module attributes {stable_mosaic.version = 11 : i64} {
  func.func @_conv1x1_kernel(%arg0: i32, %arg1: i32, %arg2: memref<8x4xf32, #tpu.memory_space<vmem>>, %arg3: memref<2x4x256xf32, #tpu.memory_space<vmem>>, %arg4: memref<2x8x256xf32, #tpu.memory_space<vmem>>) attributes {dimension_semantics = [#tpu.dimension_semantics<parallel>, #tpu.dimension_semantics<parallel>], iteration_bounds = array<i64: 1, 1>, scalar_prefetch = 0 : i64, scratch_operands = 0 : i64, tpu.core_type = #tpu.core_type<tc>, window_params = [{pipeline_mode = #tpu.pipeline_mode<synchronous>, transform_indices = @transform_0, window_bounds = array<i64: 8, 4>}, {transform_indices = @transform_1, window_bounds = array<i64: 2, 4, 256>}, {transform_indices = @transform_2, window_bounds = array<i64: 2, 8, 256>}]} {
    %c0 = arith.constant 0 : index
    %c0_0 = arith.constant 0 : index
    %0 = vector.load %arg2[%c0, %c0_0] : memref<8x4xf32, #tpu.memory_space<vmem>>, vector<8x4xf32>
    %c0_i32 = arith.constant 0 : i32
    %1 = arith.index_cast %c0_i32 : i32 to index
    %c0_1 = arith.constant 0 : index
    %c0_2 = arith.constant 0 : index
    %2 = vector.load %arg3[%1, %c0_1, %c0_2] : memref<2x4x256xf32, #tpu.memory_space<vmem>>, vector<1x4x256xf32>
    %3 = vector.shape_cast %2 : vector<1x4x256xf32> to vector<4x256xf32>
    %cst = arith.constant dense<0.000000e+00> : vector<8x256xf32>
    %4 = tpu.matmul %0, %3, %cst {dimension_numbers = #tpu.dot_dimension_numbers<[1], [0], [0], [1], [0, 0, 1, 1], [], []>} : vector<8x4xf32>, vector<4x256xf32>, vector<8x256xf32> -> vector<8x256xf32>
    %5 = arith.index_cast %c0_i32 : i32 to index
    %c0_3 = arith.constant 0 : index
    %c0_4 = arith.constant 0 : index
    %6 = vector.load %arg4[%5, %c0_3, %c0_4] : memref<2x8x256xf32, #tpu.memory_space<vmem>>, vector<1x8x256xf32>
    %7 = vector.shape_cast %6 : vector<1x8x256xf32> to vector<8x256xf32>
    %8 = vector.shape_cast %4 : vector<8x256xf32> to vector<1x8x256xf32>
    tpu.vector_store %arg4[%5, %c0_3, %c0_4], %8 {strides = array<i32>} : memref<2x8x256xf32, #tpu.memory_space<vmem>>, vector<1x8x256xf32>,
    %c1_i32 = arith.constant 1 : i32
    %9 = arith.index_cast %c1_i32 : i32 to index
    %c0_5 = arith.constant 0 : index
    %c0_6 = arith.constant 0 : index
    %10 = vector.load %arg3[%9, %c0_5, %c0_6] : memref<2x4x256xf32, #tpu.memory_space<vmem>>, vector<1x4x256xf32>
    %11 = vector.shape_cast %10 : vector<1x4x256xf32> to vector<4x256xf32>
    %cst_7 = arith.constant dense<0.000000e+00> : vector<8x256xf32>
    %12 = tpu.matmul %0, %11, %cst_7 {dimension_numbers = #tpu.dot_dimension_numbers<[1], [0], [0], [1], [0, 0, 1, 1], [], []>} : vector<8x4xf32>, vector<4x256xf32>, vector<8x256xf32> -> vector<8x256xf32>
    %13 = arith.index_cast %c1_i32 : i32 to index
    %c0_8 = arith.constant 0 : index
    %c0_9 = arith.constant 0 : index
    %14 = vector.load %arg4[%13, %c0_8, %c0_9] : memref<2x8x256xf32, #tpu.memory_space<vmem>>, vector<1x8x256xf32>
    %15 = vector.shape_cast %14 : vector<1x8x256xf32> to vector<8x256xf32>
    %16 = vector.shape_cast %12 : vector<8x256xf32> to vector<1x8x256xf32>
    tpu.vector_store %arg4[%13, %c0_8, %c0_9], %16 {strides = array<i32>} : memref<2x8x256xf32, #tpu.memory_space<vmem>>, vector<1x8x256xf32>,
    %c2_i32 = arith.constant 2 : i32
    return
  }
  func.func @transform_0(%arg0: i32, %arg1: i32) -> (i32, i32) {
    %c0_i32 = arith.constant 0 : i32
    %c0_i32_0 = arith.constant 0 : i32
    %c0_i32_1 = arith.constant 0 : i32
    return %c0_i32, %c0_i32_0 : i32, i32
  }
  func.func @transform_1(%arg0: i32, %arg1: i32) -> (i32, i32, i32) {
    %c0_i32 = arith.constant 0 : i32
    %c0_i32_0 = arith.constant 0 : i32
    return %arg1, %c0_i32, %arg0 : i32, i32, i32
  }
  func.func @transform_2(%arg0: i32, %arg1: i32) -> (i32, i32, i32) {
    %c0_i32 = arith.constant 0 : i32
    %c0_i32_0 = arith.constant 0 : i32
    return %arg1, %c0_i32, %arg0 : i32, i32, i32
  }
}

</mosaic_0001>

<llo_original>
// kernel: tpu_custom_call.1
$region0: #{tpu_custom_call.1}
  #allocation0 [shape = 'u32[]', space=smem, size = 0x4, offset = 0x4, fixed_abs, tag = 'smem constant byte address 0x4 - core index']
  #allocation1 [shape = 'u32[144,128]{1,0:T(1,128)}', space=vmem, size = 0x12000, scoped, tag = 'internal scratch']
  %s0 = inlined_call_operand.vmem [shape: f32[8,4], index: 0, kind: input, shape index: {}]
  %s1 = inlined_call_operand.hbm [shape: f32[2,4,256], index: 1, kind: input, shape index: {}]
  %s2 = inlined_call_operand.hbm [shape: f32[2,8,256], index: 2, kind: output, shape index: {}]
  %s3 = sld [smem:[#allocation0]]
  $region22: #{tpu_custom_call.1} parent=0
    _
  %s5 = ssub.s32 1, %s3
  %s6 = scalar_select 0, %s5, %s3
  $region1: #{tpu_custom_call.1} parent=0
    #allocation2 [shape = 'u8[8192]{0}', space=vmem, size = 0x2000, scoped, tag = 'input window, operand 1, single buffered']
    #allocation3 [shape = 's32[1]{0}', space=sflag, size = 0x4, scoped, tag = 'scoped memory for tpu_custom_call.1']
    #allocation4 [shape = 's32[1]{0}', space=sflag, size = 0x4, scoped, tag = 'scoped memory for tpu_custom_call.1']
    #allocation5 [shape = 'u8[16384]{0}', space=vmem, size = 0x4000, scoped, tag = 'output window, operand 0, single buffered']
    %7 = vsyncpa [#allocation3], 0
    %8 = vsyncpa [#allocation4], 0
    // Predicated region
    $region2: #{tpu_custom_call.1} parent=1 // pred_check
      _
    $region3: #{tpu_custom_call.1} parent=1 // pred_check_branch
      %10 = sbr.rel (0) target = $region5
    $region4: #{tpu_custom_call.1} parent=1 // pred_region
      _
    $region5: #{tpu_custom_call.1} parent=1 // pred_fallthru
      _
    // Predicated region
    $region6: #{tpu_custom_call.1} parent=1 // pred_check
      _
    $region7: #{tpu_custom_call.1} parent=1 // pred_check_branch
      %12 = sbr.rel (0) target = $region9
    $region8: #{tpu_custom_call.1} parent=1 // pred_region
      %s14 = ssub.s32 256, 256
      %15 = vsyncadd [#allocation3], %s14
      %s16 = sshll.u32 [#allocation2], 4
      %s17 = int_to_ptr.vmem [resolvable:$true] %s16
      %22 = dma.hbm_to_vmem [thread:$0]  %s1, 256, %s17, [#allocation3], 128, 128, 8
    $region9: #{tpu_custom_call.1} parent=1 // pred_fallthru
      _
    // Predicated region
    $region10: #{tpu_custom_call.1} parent=1 // pred_check
      _
    $region11: #{tpu_custom_call.1} parent=1 // pred_check_branch
      %24 = sbr.rel (0) target = $region13
    $region12: #{tpu_custom_call.1} parent=1 // pred_region
      %25 = dma.done [#allocation3], 256
    $region13: #{tpu_custom_call.1} parent=1 // pred_fallthru
      _
    %v26 = vld [vmem:[%s0] sm:$0xff]
    %v27 = vld [vmem:[#allocation2] sm:$0xff]
    %v29 = vcombine.high %v27, %v27
    %vm30 = vcmask 31744
    %v32 = vsel %vm30, %v26, 0
    %vm34 = vcmask 1043456
    %v35 = vsel %vm34, %v27, 0
    %v37 = vsel %vm34, %v29, 0
    %39 = vmatprep.subr.mxu0 %v37
    %40 = vmatpush1.msra.mxu0 %v35
    %41 = vmatprep.subr.mxu0 0.0
    %42 = vmatpush1.msra.mxu0 0.0
    %43 = vmatprep.subr.mxu0 0.0
    %44 = vmatpush1.msra.mxu0 0.0
    %45 = vmatprep.subr.mxu0 0.0
    %46 = vmatpush1.msra.mxu0 0.0
    %47 = vmatprep.subr.mxu0 0.0
    %48 = vmatpush1.msra.mxu0 0.0
    %49 = vmatprep.subr.mxu0 0.0
    %50 = vmatpush1.msra.mxu0 0.0
    %51 = vmatprep.subr.mxu0 0.0
    %52 = vmatpush1.msra.mxu0 0.0
    %53 = vmatprep.subr.mxu0 0.0
    %54 = vmatpush1.msra.mxu0 0.0
    %55 = vmatprep.subr.mxu0 0.0
    %56 = vmatpush1.msra.mxu0 0.0
    %57 = vmatprep.subr.mxu0 0.0
    %58 = vmatpush1.msra.mxu0 0.0
    %59 = vmatprep.subr.mxu0 0.0
    %60 = vmatpush1.msra.mxu0 0.0
    %61 = vmatprep.subr.mxu0 0.0
    %62 = vmatpush1.msra.mxu0 0.0
    %63 = vmatprep.subr.mxu0 0.0
    %64 = vmatpush1.msra.mxu0 0.0
    %65 = vmatprep.subr.mxu0 0.0
    %66 = vmatpush1.msra.mxu0 0.0
    %67 = vmatprep.subr.mxu0 0.0
    %68 = vmatpush1.msra.mxu0 0.0
    %69 = vmatprep.subr.mxu0 0.0
    %70 = vmatpush1.msra.mxu0 0.0
    %71 = vmatprep.subr.mxu0 0.0
    %72 = vmatpush1.msra.mxu0 0.0
    %73 = vmatprep.subr.mxu0 0.0
    %74 = vmatpush1.msra.mxu0 0.0
    %75 = vmatprep.subr.mxu0 0.0
    %76 = vmatpush1.msra.mxu0 0.0
    %77 = vmatprep.subr.mxu0 0.0
    %78 = vmatpush1.msra.mxu0 0.0
    %79 = vmatprep.subr.mxu0 0.0
    %80 = vmatpush1.msra.mxu0 0.0
    %81 = vmatprep.subr.mxu0 0.0
    %82 = vmatpush1.msra.mxu0 0.0
    %83 = vmatprep.subr.mxu0 0.0
    %84 = vmatpush1.msra.mxu0 0.0
    %85 = vmatprep.subr.mxu0 0.0
    %86 = vmatpush1.msra.mxu0 0.0
    %87 = vmatprep.subr.mxu0 0.0
    %88 = vmatpush1.msra.mxu0 0.0
    %89 = vmatprep.subr.mxu0 0.0
    %90 = vmatpush1.msra.mxu0 0.0
    %91 = vmatprep.subr.mxu0 0.0
    %92 = vmatpush1.msra.mxu0 0.0
    %93 = vmatprep.subr.mxu0 0.0
    %94 = vmatpush1.msra.mxu0 0.0
    %95 = vmatprep.subr.mxu0 0.0
    %96 = vmatpush1.msra.mxu0 0.0
    %97 = vmatprep.subr.mxu0 0.0
    %98 = vmatpush1.msra.mxu0 0.0
    %99 = vmatprep.subr.mxu0 0.0
    %100 = vmatpush1.msra.mxu0 0.0
    %101 = vmatprep.subr.mxu0 0.0
    %102 = vmatpush1.msra.mxu0 0.0
    %103 = vmatprep.mubr.f32.mxu0 0.0
    %104 = vmatmul.mubr.f32.gmra.mrb[0].mxu0 %v32
    %v105 = vpop.f32.mrb[0].mxu0
    %v106 = vadd.f32 0.0, %v105
    %v107 = vpop.f32.mrb[0].mxu0
    %v108 = vadd.f32 0.0, %v107
    %109 = vdwg.mxu0
    %110 = vst [vmem:[#allocation5] sm:$0xff] %v106
    %111 = vst [vmem:[#allocation5 + $0x8] sm:$0xff] %v108
    %s112 = scalar_lea.vmem [#allocation2], 8
    %v113 = vld [vmem:[%s112] sm:$0xff]
    %v115 = vcombine.high %v113, %v113
    %v116 = vsel %vm34, %v113, 0
    %v118 = vsel %vm34, %v115, 0
    %120 = vmatprep.subr.mxu0 %v118
    %121 = vmatpush1.msra.mxu0 %v116
    %122 = vmatprep.subr.mxu0 0.0
    %123 = vmatpush1.msra.mxu0 0.0
    %124 = vmatprep.subr.mxu0 0.0
    %125 = vmatpush1.msra.mxu0 0.0
    %126 = vmatprep.subr.mxu0 0.0
    %127 = vmatpush1.msra.mxu0 0.0
    %128 = vmatprep.subr.mxu0 0.0
    %129 = vmatpush1.msra.mxu0 0.0
    %130 = vmatprep.subr.mxu0 0.0
    %131 = vmatpush1.msra.mxu0 0.0
    %132 = vmatprep.subr.mxu0 0.0
    %133 = vmatpush1.msra.mxu0 0.0
    %134 = vmatprep.subr.mxu0 0.0
    %135 = vmatpush1.msra.mxu0 0.0
    %136 = vmatprep.subr.mxu0 0.0
    %137 = vmatpush1.msra.mxu0 0.0
    %138 = vmatprep.subr.mxu0 0.0
    %139 = vmatpush1.msra.mxu0 0.0
    %140 = vmatprep.subr.mxu0 0.0
    %141 = vmatpush1.msra.mxu0 0.0
    %142 = vmatprep.subr.mxu0 0.0
    %143 = vmatpush1.msra.mxu0 0.0
    %144 = vmatprep.subr.mxu0 0.0
    %145 = vmatpush1.msra.mxu0 0.0
    %146 = vmatprep.subr.mxu0 0.0
    %147 = vmatpush1.msra.mxu0 0.0
    %148 = vmatprep.subr.mxu0 0.0
    %149 = vmatpush1.msra.mxu0 0.0
    %150 = vmatprep.subr.mxu0 0.0
    %151 = vmatpush1.msra.mxu0 0.0
    %152 = vmatprep.subr.mxu0 0.0
    %153 = vmatpush1.msra.mxu0 0.0
    %154 = vmatprep.subr.mxu0 0.0
    %155 = vmatpush1.msra.mxu0 0.0
    %156 = vmatprep.subr.mxu0 0.0
    %157 = vmatpush1.msra.mxu0 0.0
    %158 = vmatprep.subr.mxu0 0.0
    %159 = vmatpush1.msra.mxu0 0.0
    %160 = vmatprep.subr.mxu0 0.0
    %161 = vmatpush1.msra.mxu0 0.0
    %162 = vmatprep.subr.mxu0 0.0
    %163 = vmatpush1.msra.mxu0 0.0
    %164 = vmatprep.subr.mxu0 0.0
    %165 = vmatpush1.msra.mxu0 0.0
    %166 = vmatprep.subr.mxu0 0.0
    %167 = vmatpush1.msra.mxu0 0.0
    %168 = vmatprep.subr.mxu0 0.0
    %169 = vmatpush1.msra.mxu0 0.0
    %170 = vmatprep.subr.mxu0 0.0
    %171 = vmatpush1.msra.mxu0 0.0
    %172 = vmatprep.subr.mxu0 0.0
    %173 = vmatpush1.msra.mxu0 0.0
    %174 = vmatprep.subr.mxu0 0.0
    %175 = vmatpush1.msra.mxu0 0.0
    %176 = vmatprep.subr.mxu0 0.0
    %177 = vmatpush1.msra.mxu0 0.0
    %178 = vmatprep.subr.mxu0 0.0
    %179 = vmatpush1.msra.mxu0 0.0
    %180 = vmatprep.subr.mxu0 0.0
    %181 = vmatpush1.msra.mxu0 0.0
    %182 = vmatprep.subr.mxu0 0.0
    %183 = vmatpush1.msra.mxu0 0.0
    %184 = vmatprep.mubr.f32.mxu0 0.0
    %185 = vmatmul.mubr.f32.gmra.mrb[0].mxu0 %v32
    %v186 = vpop.f32.mrb[0].mxu0
    %v187 = vadd.f32 0.0, %v186
    %v188 = vpop.f32.mrb[0].mxu0
    %v189 = vadd.f32 0.0, %v188
    %190 = vdwg.mxu0
    %s191 = scalar_lea.vmem [#allocation5], 16
    %192 = vst [vmem:[%s191] sm:$0xff] %v187
    %193 = vst [vmem:[%s191 + $0x8] sm:$0xff] %v189
    // Predicated region
    $region14: #{tpu_custom_call.1} parent=1 // pred_check
      _
    $region15: #{tpu_custom_call.1} parent=1 // pred_check_branch
      %195 = sbr.rel (0) target = $region17
    $region16: #{tpu_custom_call.1} parent=1 // pred_region
      %s197 = ssub.s32 512, 512
      %198 = vsyncadd [#allocation4], %s197
      %s199 = sshll.u32 [#allocation5], 4
      %s200 = int_to_ptr.vmem [resolvable:$true] %s199
      %205 = dma.vmem_to_hbm [thread:$0]  %s200, 512, %s2, [#allocation4], 256, 256, 16
    $region17: #{tpu_custom_call.1} parent=1 // pred_fallthru
      _
    // Predicated region
    $region18: #{tpu_custom_call.1} parent=1 // pred_check
      _
    $region19: #{tpu_custom_call.1} parent=1 // pred_check_branch
      %207 = sbr.rel (0) target = $region21
    $region20: #{tpu_custom_call.1} parent=1 // pred_region
      %208 = dma.done [#allocation4], 512
    $region21: #{tpu_custom_call.1} parent=1 // pred_fallthru
      _
    %209 = vsyncpa [#allocation3], 1
    %210 = vsyncpa [#allocation4], 1

</llo_original>
